<compile_context>
chip_gen: v5e
topology: v5e:2x2
jax: 0.10.0
libtpu: 0.0.40
codegen_flags: <defaults>
</compile_context>

<pallas_src>
import functools

import jax
import jax.numpy as jnp
from jax import lax
from jax.experimental import pallas as pl
from jax.experimental.pallas import tpu as pltpu  # noqa: F401  (kept for TPU backend parity)

# Production choice per review is approx=True (EUP vrcp, frees VALU slots).
# Kept exact here so the test below can assert 1e-5 parity vs the f32 reference.
APPROX_RECIPROCAL = False


def _mha_kernel(x_ref, wqkv_ref, bqkv_ref, wo_ref, bo_ref, o_ref, *,
                num_heads, batch):
    """Multi-head self-attention over ALL batch elements in one invocation.

    x_ref : (B*S, E), batch-major rows; weights pre-transposed so proj = x @ W + b.
    """
    BS, E = x_ref.shape
    B = batch
    S = BS // B
    H = num_heads
    Dh = E // H
    scale = 1.0 / (Dh ** 0.5)

    x = x_ref[...]                                            # (B*S, E)

    # Fused Q/K/V projection: one lane-dense (B*S, E) @ (E, 3E) matmul + one bias.
    qkv = jnp.dot(x, wqkv_ref[...],
                  preferred_element_type=jnp.float32) + bqkv_ref[...]
    q = qkv[:, :E] * scale                                    # (B*S, E)
    k = qkv[:, E:2 * E]
    v = qkv[:, 2 * E:]

    wo = wo_ref[...]                                          # (E, E)
    bo = bo_ref[...]                                          # (1, E)

    for b in range(B):                                        # static, B small
        rows = slice(b * S, (b + 1) * S)                      # sublane-aligned (S == 8)
        qb, kb, vb = q[rows], k[rows], v[rows]                # (S, E)

        acc = jnp.zeros((S, E), jnp.float32)
        for h in range(H):                                    # static
            cols = slice(h * Dh, (h + 1) * Dh)
            qh, kh, vh = qb[:, cols], kb[:, cols], vb[:, cols]  # (S, Dh)

            # scores = q @ k^T without materializing k^T (contract last dims).
            s = lax.dot_general(qh, kh, (((1,), (1,)), ((), ())),
                                preferred_element_type=jnp.float32)  # (S, S)
            s = s - jnp.max(s, axis=-1, keepdims=True)
            p = jnp.exp(s)
            p = p * pl.reciprocal(jnp.sum(p, axis=-1, keepdims=True),
                                  approx=APPROX_RECIPROCAL)

            ctx_h = jnp.dot(p, vh, preferred_element_type=jnp.float32)  # (S, Dh)
            # Fold the output projection per head: no lane-axis concat needed.
            acc = acc + jnp.dot(ctx_h, wo[h * Dh:(h + 1) * Dh, :],
                                preferred_element_type=jnp.float32)     # (S, E)

        o_ref[rows, :] = (acc + bo).astype(o_ref.dtype)


def attention_layer(x, params, num_heads):
    """x: (S, B, E) float32 (PyTorch seq-first layout). Returns (S, B, E)."""
    S, B, E = x.shape
    assert E % num_heads == 0, "embed_dim must be divisible by num_heads"
    wqkv, bqkv, wo, bo = params

    # Batch-major 2-D slab (B*S, E); kernel handles every batch element itself.
    xb = jnp.transpose(x, (1, 0, 2)).reshape(B * S, E)

    kern = functools.partial(_mha_kernel, num_heads=num_heads, batch=B)

    out = pl.pallas_call(
        kern,
        out_shape=jax.ShapeDtypeStruct((B * S, E), x.dtype),
    )(xb, wqkv, bqkv, wo, bo)

    return out.reshape(B, S, E).transpose(1, 0, 2)            # back to (S, B, E)


def init_params(key, embed_dim):
    """Deterministic synthetic params matching nn.MultiheadAttention shapes."""
    E = embed_dim
    k1, k2, k3 = jax.random.split(key, 3)
    # PyTorch: in_proj_weight (3E, E), in_proj_bias (3E,), out_proj (E, E) + (E,)
    in_proj_w = jax.random.normal(k1, (3 * E, E), jnp.float32) * 0.05
    in_proj_b = jax.random.normal(k2, (3 * E,), jnp.float32) * 0.05
    out_w = jax.random.normal(k3, (E, E), jnp.float32) * 0.05
    out_b = jnp.zeros((E,), jnp.float32)

    # Pre-transpose + fuse so the kernel computes x @ Wqkv + b in ONE matmul.
    # (PyTorch computes x @ W^T + b; in_proj_w.T == [Wq^T | Wk^T | Wv^T].)
    wqkv = in_proj_w.T                      # (E, 3E)
    bqkv = in_proj_b.reshape(1, 3 * E)      # (1, 3E)
    wo = out_w.T                            # (E, E)
    bo = out_b.reshape(1, E)                # (1, E)
    return (wqkv, bqkv, wo, bo)


def reference_mha(x, params, num_heads):
    """Pure-JAX reference of PyTorch nn.MultiheadAttention self-attention."""
    wqkv, bqkv, wo, bo = params
    S, B, E = x.shape
    H = num_heads
    Dh = E // H
    xb = jnp.transpose(x, (1, 0, 2))                          # (B, S, E)
    qkv = xb @ wqkv + bqkv                                    # (B, S, 3E)
    q, k, v = qkv[..., :E], qkv[..., E:2 * E], qkv[..., 2 * E:]
    qh = q.reshape(B, S, H, Dh).transpose(0, 2, 1, 3)
    kh = k.reshape(B, S, H, Dh).transpose(0, 2, 1, 3)
    vh = v.reshape(B, S, H, Dh).transpose(0, 2, 1, 3)
    s = jnp.einsum('bhqd,bhkd->bhqk', qh, kh) / (Dh ** 0.5)
    p = jax.nn.softmax(s, axis=-1)
    ctx = jnp.einsum('bhqk,bhkd->bhqd', p, vh).transpose(0, 2, 1, 3).reshape(B, S, E)
    out = ctx @ wo + bo
    return jnp.transpose(out, (1, 0, 2))                      # (S, B, E)


if __name__ == "__main__":
    SEQ, BATCH, EMBED, HEADS = 8, 2, 32, 4

    key = jax.random.PRNGKey(0)
    kx, kp = jax.random.split(key)
    x = jax.random.normal(kx, (SEQ, BATCH, EMBED), jnp.float32)
    params = init_params(kp, EMBED)

    out = attention_layer(x, params, HEADS)
    out = jax.block_until_ready(out)

    ref = reference_mha(x, params, HEADS)
    assert out.shape == (SEQ, BATCH, EMBED)
    assert jnp.allclose(out, ref, atol=1e-5, rtol=1e-5)

    print("KERNEL_OK")
</pallas_src>

<mosaic_0001>
module attributes {stable_mosaic.version = 11 : i64} {
  func.func @_mha_kernel(%arg0: memref<16x32xf32, #tpu.memory_space<vmem>>, %arg1: memref<32x96xf32, #tpu.memory_space<vmem>>, %arg2: memref<1x96xf32, #tpu.memory_space<vmem>>, %arg3: memref<32x32xf32, #tpu.memory_space<vmem>>, %arg4: memref<1x32xf32, #tpu.memory_space<vmem>>, %arg5: memref<16x32xf32, #tpu.memory_space<vmem>>) attributes {dimension_semantics = [], scalar_prefetch = 0 : i64, scratch_operands = 0 : i64, tpu.core_type = #tpu.core_type<tc>} {
    %c0 = arith.constant 0 : index
    %c0_0 = arith.constant 0 : index
    %0 = vector.load %arg0[%c0, %c0_0] : memref<16x32xf32, #tpu.memory_space<vmem>>, vector<16x32xf32>
    %c0_1 = arith.constant 0 : index
    %c0_2 = arith.constant 0 : index
    %1 = vector.load %arg1[%c0_1, %c0_2] : memref<32x96xf32, #tpu.memory_space<vmem>>, vector<32x96xf32>
    %cst = arith.constant dense<0.000000e+00> : vector<16x96xf32>
    %2 = tpu.matmul %0, %1, %cst {dimension_numbers = #tpu.dot_dimension_numbers<[1], [0], [0], [1], [0, 0, 1, 1], [], []>} : vector<16x32xf32>, vector<32x96xf32>, vector<16x96xf32> -> vector<16x96xf32>
    %c0_3 = arith.constant 0 : index
    %c0_4 = arith.constant 0 : index
    %3 = vector.load %arg2[%c0_3, %c0_4] : memref<1x96xf32, #tpu.memory_space<vmem>>, vector<1x96xf32>
    %4 = vector.broadcast %3 : vector<1x96xf32> to vector<16x96xf32>
    %5 = arith.addf %2, %4 : vector<16x96xf32>
    %6 = vector.extract_strided_slice %5 {offsets = [0, 0], sizes = [16, 32], strides = [1, 1]} : vector<16x96xf32> to vector<16x32xf32>
    %cst_5 = arith.constant 0.353553385 : f32
    %7 = vector.broadcast %cst_5 : f32 to vector<16x32xf32>
    %8 = arith.mulf %6, %7 : vector<16x32xf32>
    %9 = vector.extract_strided_slice %5 {offsets = [0, 32], sizes = [16, 32], strides = [1, 1]} : vector<16x96xf32> to vector<16x32xf32>
    %10 = vector.extract_strided_slice %5 {offsets = [0, 64], sizes = [16, 32], strides = [1, 1]} : vector<16x96xf32> to vector<16x32xf32>
    %c0_6 = arith.constant 0 : index
    %c0_7 = arith.constant 0 : index
    %11 = vector.load %arg3[%c0_6, %c0_7] : memref<32x32xf32, #tpu.memory_space<vmem>>, vector<32x32xf32>
    %c0_8 = arith.constant 0 : index
    %c0_9 = arith.constant 0 : index
    %12 = vector.load %arg4[%c0_8, %c0_9] : memref<1x32xf32, #tpu.memory_space<vmem>>, vector<1x32xf32>
    %13 = vector.extract_strided_slice %8 {offsets = [0, 0], sizes = [8, 32], strides = [1, 1]} : vector<16x32xf32> to vector<8x32xf32>
    %14 = vector.extract_strided_slice %9 {offsets = [0, 0], sizes = [8, 32], strides = [1, 1]} : vector<16x32xf32> to vector<8x32xf32>
    %15 = vector.extract_strided_slice %10 {offsets = [0, 0], sizes = [8, 32], strides = [1, 1]} : vector<16x32xf32> to vector<8x32xf32>
    %cst_10 = arith.constant 0.000000e+00 : f32
    %16 = vector.broadcast %cst_10 : f32 to vector<8x32xf32>
    %17 = vector.extract_strided_slice %13 {offsets = [0, 0], sizes = [8, 8], strides = [1, 1]} : vector<8x32xf32> to vector<8x8xf32>
    %18 = vector.extract_strided_slice %14 {offsets = [0, 0], sizes = [8, 8], strides = [1, 1]} : vector<8x32xf32> to vector<8x8xf32>
    %19 = vector.extract_strided_slice %15 {offsets = [0, 0], sizes = [8, 8], strides = [1, 1]} : vector<8x32xf32> to vector<8x8xf32>
    %cst_11 = arith.constant dense<0.000000e+00> : vector<8x8xf32>
    %20 = tpu.matmul %17, %18, %cst_11 {dimension_numbers = #tpu.dot_dimension_numbers<[1], [1], [0], [0], [0, 0, 1, 0], [], []>} : vector<8x8xf32>, vector<8x8xf32>, vector<8x8xf32> -> vector<8x8xf32>
    %cst_12 = arith.constant dense<0xFF800000> : vector<8xf32>
    %21 = vector.multi_reduction <maximumf>, %20, %cst_12 [1] : vector<8x8xf32> to vector<8xf32>
    %22 = vector.shape_cast %21 : vector<8xf32> to vector<8x1xf32>
    %23 = vector.broadcast %22 : vector<8x1xf32> to vector<8x8xf32>
    %24 = arith.subf %20, %23 : vector<8x8xf32>
    %25 = math.exp %24 : vector<8x8xf32>
    %cst_13 = arith.constant dense<0.000000e+00> : vector<8xf32>
    %26 = vector.multi_reduction <add>, %25, %cst_13 [1] : vector<8x8xf32> to vector<8xf32>
    %27 = vector.shape_cast %26 : vector<8xf32> to vector<8x1xf32>
    %28 = tpu.reciprocal %27 : vector<8x1xf32> -> vector<8x1xf32>
    %29 = vector.broadcast %28 : vector<8x1xf32> to vector<8x8xf32>
    %30 = arith.mulf %25, %29 : vector<8x8xf32>
    %cst_14 = arith.constant dense<0.000000e+00> : vector<8x8xf32>
    %31 = tpu.matmul %30, %19, %cst_14 {dimension_numbers = #tpu.dot_dimension_numbers<[1], [0], [0], [1], [0, 0, 1, 1], [], []>} : vector<8x8xf32>, vector<8x8xf32>, vector<8x8xf32> -> vector<8x8xf32>
    %32 = vector.extract_strided_slice %11 {offsets = [0, 0], sizes = [8, 32], strides = [1, 1]} : vector<32x32xf32> to vector<8x32xf32>
    %cst_15 = arith.constant dense<0.000000e+00> : vector<8x32xf32>
    %33 = tpu.matmul %31, %32, %cst_15 {dimension_numbers = #tpu.dot_dimension_numbers<[1], [0], [0], [1], [0, 0, 1, 1], [], []>} : vector<8x8xf32>, vector<8x32xf32>, vector<8x32xf32> -> vector<8x32xf32>
    %34 = arith.addf %16, %33 : vector<8x32xf32>
    %35 = vector.extract_strided_slice %13 {offsets = [0, 8], sizes = [8, 8], strides = [1, 1]} : vector<8x32xf32> to vector<8x8xf32>
    %36 = vector.extract_strided_slice %14 {offsets = [0, 8], sizes = [8, 8], strides = [1, 1]} : vector<8x32xf32> to vector<8x8xf32>
    %37 = vector.extract_strided_slice %15 {offsets = [0, 8], sizes = [8, 8], strides = [1, 1]} : vector<8x32xf32> to vector<8x8xf32>
    %cst_16 = arith.constant dense<0.000000e+00> : vector<8x8xf32>
    %38 = tpu.matmul %35, %36, %cst_16 {dimension_numbers = #tpu.dot_dimension_numbers<[1], [1], [0], [0], [0, 0, 1, 0], [], []>} : vector<8x8xf32>, vector<8x8xf32>, vector<8x8xf32> -> vector<8x8xf32>
    %cst_17 = arith.constant dense<0xFF800000> : vector<8xf32>
    %39 = vector.multi_reduction <maximumf>, %38, %cst_17 [1] : vector<8x8xf32> to vector<8xf32>
    %40 = vector.shape_cast %39 : vector<8xf32> to vector<8x1xf32>
    %41 = vector.broadcast %40 : vector<8x1xf32> to vector<8x8xf32>
    %42 = arith.subf %38, %41 : vector<8x8xf32>
    %43 = math.exp %42 : vector<8x8xf32>
    %cst_18 = arith.constant dense<0.000000e+00> : vector<8xf32>
    %44 = vector.multi_reduction <add>, %43, %cst_18 [1] : vector<8x8xf32> to vector<8xf32>
    %45 = vector.shape_cast %44 : vector<8xf32> to vector<8x1xf32>
    %46 = tpu.reciprocal %45 : vector<8x1xf32> -> vector<8x1xf32>
    %47 = vector.broadcast %46 : vector<8x1xf32> to vector<8x8xf32>
    %48 = arith.mulf %43, %47 : vector<8x8xf32>
    %cst_19 = arith.constant dense<0.000000e+00> : vector<8x8xf32>
    %49 = tpu.matmul %48, %37, %cst_19 {dimension_numbers = #tpu.dot_dimension_numbers<[1], [0], [0], [1], [0, 0, 1, 1], [], []>} : vector<8x8xf32>, vector<8x8xf32>, vector<8x8xf32> -> vector<8x8xf32>
    %50 = vector.extract_strided_slice %11 {offsets = [8, 0], sizes = [8, 32], strides = [1, 1]} : vector<32x32xf32> to vector<8x32xf32>
    %cst_20 = arith.constant dense<0.000000e+00> : vector<8x32xf32>
    %51 = tpu.matmul %49, %50, %cst_20 {dimension_numbers = #tpu.dot_dimension_numbers<[1], [0], [0], [1], [0, 0, 1, 1], [], []>} : vector<8x8xf32>, vector<8x32xf32>, vector<8x32xf32> -> vector<8x32xf32>
    %52 = arith.addf %34, %51 : vector<8x32xf32>
    %53 = vector.extract_strided_slice %13 {offsets = [0, 16], sizes = [8, 8], strides = [1, 1]} : vector<8x32xf32> to vector<8x8xf32>
    %54 = vector.extract_strided_slice %14 {offsets = [0, 16], sizes = [8, 8], strides = [1, 1]} : vector<8x32xf32> to vector<8x8xf32>
    %55 = vector.extract_strided_slice %15 {offsets = [0, 16], sizes = [8, 8], strides = [1, 1]} : vector<8x32xf32> to vector<8x8xf32>
    %cst_21 = arith.constant dense<0.000000e+00> : vector<8x8xf32>
    %56 = tpu.matmul %53, %54, %cst_21 {dimension_numbers = #tpu.dot_dimension_numbers<[1], [1], [0], [0], [0, 0, 1, 0], [], []>} : vector<8x8xf32>, vector<8x8xf32>, vector<8x8xf32> -> vector<8x8xf32>
    %cst_22 = arith.constant dense<0xFF800000> : vector<8xf32>
    %57 = vector.multi_reduction <maximumf>, %56, %cst_22 [1] : vector<8x8xf32> to vector<8xf32>
    %58 = vector.shape_cast %57 : vector<8xf32> to vector<8x1xf32>
    %59 = vector.broadcast %58 : vector<8x1xf32> to vector<8x8xf32>
    %60 = arith.subf %56, %59 : vector<8x8xf32>
    %61 = math.exp %60 : vector<8x8xf32>
    %cst_23 = arith.constant dense<0.000000e+00> : vector<8xf32>
    %62 = vector.multi_reduction <add>, %61, %cst_23 [1] : vector<8x8xf32> to vector<8xf32>
    %63 = vector.shape_cast %62 : vector<8xf32> to vector<8x1xf32>
    %64 = tpu.reciprocal %63 : vector<8x1xf32> -> vector<8x1xf32>
    %65 = vector.broadcast %64 : vector<8x1xf32> to vector<8x8xf32>
    %66 = arith.mulf %61, %65 : vector<8x8xf32>
    %cst_24 = arith.constant dense<0.000000e+00> : vector<8x8xf32>
    %67 = tpu.matmul %66, %55, %cst_24 {dimension_numbers = #tpu.dot_dimension_numbers<[1], [0], [0], [1], [0, 0, 1, 1], [], []>} : vector<8x8xf32>, vector<8x8xf32>, vector<8x8xf32> -> vector<8x8xf32>
    %68 = vector.extract_strided_slice %11 {offsets = [16, 0], sizes = [8, 32], strides = [1, 1]} : vector<32x32xf32> to vector<8x32xf32>
    %cst_25 = arith.constant dense<0.000000e+00> : vector<8x32xf32>
    %69 = tpu.matmul %67, %68, %cst_25 {dimension_numbers = #tpu.dot_dimension_numbers<[1], [0], [0], [1], [0, 0, 1, 1], [], []>} : vector<8x8xf32>, vector<8x32xf32>, vector<8x32xf32> -> vector<8x32xf32>
    %70 = arith.addf %52, %69 : vector<8x32xf32>
    %71 = vector.extract_strided_slice %13 {offsets = [0, 24], sizes = [8, 8], strides = [1, 1]} : vector<8x32xf32> to vector<8x8xf32>
    %72 = vector.extract_strided_slice %14 {offsets = [0, 24], sizes = [8, 8], strides = [1, 1]} : vector<8x32xf32> to vector<8x8xf32>
    %73 = vector.extract_strided_slice %15 {offsets = [0, 24], sizes = [8, 8], strides = [1, 1]} : vector<8x32xf32> to vector<8x8xf32>
    %cst_26 = arith.constant dense<0.000000e+00> : vector<8x8xf32>
    %74 = tpu.matmul %71, %72, %cst_26 {dimension_numbers = #tpu.dot_dimension_numbers<[1], [1], [0], [0], [0, 0, 1, 0], [], []>} : vector<8x8xf32>, vector<8x8xf32>, vector<8x8xf32> -> vector<8x8xf32>
    %cst_27 = arith.constant dense<0xFF800000> : vector<8xf32>
    %75 = vector.multi_reduction <maximumf>, %74, %cst_27 [1] : vector<8x8xf32> to vector<8xf32>
    %76 = vector.shape_cast %75 : vector<8xf32> to vector<8x1xf32>
    %77 = vector.broadcast %76 : vector<8x1xf32> to vector<8x8xf32>
    %78 = arith.subf %74, %77 : vector<8x8xf32>
    %79 = math.exp %78 : vector<8x8xf32>
    %cst_28 = arith.constant dense<0.000000e+00> : vector<8xf32>
    %80 = vector.multi_reduction <add>, %79, %cst_28 [1] : vector<8x8xf32> to vector<8xf32>
    %81 = vector.shape_cast %80 : vector<8xf32> to vector<8x1xf32>
    %82 = tpu.reciprocal %81 : vector<8x1xf32> -> vector<8x1xf32>
    %83 = vector.broadcast %82 : vector<8x1xf32> to vector<8x8xf32>
    %84 = arith.mulf %79, %83 : vector<8x8xf32>
    %cst_29 = arith.constant dense<0.000000e+00> : vector<8x8xf32>
    %85 = tpu.matmul %84, %73, %cst_29 {dimension_numbers = #tpu.dot_dimension_numbers<[1], [0], [0], [1], [0, 0, 1, 1], [], []>} : vector<8x8xf32>, vector<8x8xf32>, vector<8x8xf32> -> vector<8x8xf32>
    %86 = vector.extract_strided_slice %11 {offsets = [24, 0], sizes = [8, 32], strides = [1, 1]} : vector<32x32xf32> to vector<8x32xf32>
    %cst_30 = arith.constant dense<0.000000e+00> : vector<8x32xf32>
    %87 = tpu.matmul %85, %86, %cst_30 {dimension_numbers = #tpu.dot_dimension_numbers<[1], [0], [0], [1], [0, 0, 1, 1], [], []>} : vector<8x8xf32>, vector<8x32xf32>, vector<8x32xf32> -> vector<8x32xf32>
    %88 = arith.addf %70, %87 : vector<8x32xf32>
    %89 = vector.broadcast %12 : vector<1x32xf32> to vector<8x32xf32>
    %90 = arith.addf %88, %89 : vector<8x32xf32>
    %c0_31 = arith.constant 0 : index
    %c0_32 = arith.constant 0 : index
    %91 = vector.load %arg5[%c0_31, %c0_32] : memref<16x32xf32, #tpu.memory_space<vmem>>, vector<8x32xf32>
    tpu.vector_store %arg5[%c0_31, %c0_32], %90 {strides = array<i32>} : memref<16x32xf32, #tpu.memory_space<vmem>>, vector<8x32xf32>,
    %92 = vector.extract_strided_slice %8 {offsets = [8, 0], sizes = [8, 32], strides = [1, 1]} : vector<16x32xf32> to vector<8x32xf32>
    %93 = vector.extract_strided_slice %9 {offsets = [8, 0], sizes = [8, 32], strides = [1, 1]} : vector<16x32xf32> to vector<8x32xf32>
    %94 = vector.extract_strided_slice %10 {offsets = [8, 0], sizes = [8, 32], strides = [1, 1]} : vector<16x32xf32> to vector<8x32xf32>
    %cst_33 = arith.constant 0.000000e+00 : f32
    %95 = vector.broadcast %cst_33 : f32 to vector<8x32xf32>
    %96 = vector.extract_strided_slice %92 {offsets = [0, 0], sizes = [8, 8], strides = [1, 1]} : vector<8x32xf32> to vector<8x8xf32>
    %97 = vector.extract_strided_slice %93 {offsets = [0, 0], sizes = [8, 8], strides = [1, 1]} : vector<8x32xf32> to vector<8x8xf32>
    %98 = vector.extract_strided_slice %94 {offsets = [0, 0], sizes = [8, 8], strides = [1, 1]} : vector<8x32xf32> to vector<8x8xf32>
    %cst_34 = arith.constant dense<0.000000e+00> : vector<8x8xf32>
    %99 = tpu.matmul %96, %97, %cst_34 {dimension_numbers = #tpu.dot_dimension_numbers<[1], [1], [0], [0], [0, 0, 1, 0], [], []>} : vector<8x8xf32>, vector<8x8xf32>, vector<8x8xf32> -> vector<8x8xf32>
    %cst_35 = arith.constant dense<0xFF800000> : vector<8xf32>
    %100 = vector.multi_reduction <maximumf>, %99, %cst_35 [1] : vector<8x8xf32> to vector<8xf32>
    %101 = vector.shape_cast %100 : vector<8xf32> to vector<8x1xf32>
    %102 = vector.broadcast %101 : vector<8x1xf32> to vector<8x8xf32>
    %103 = arith.subf %99, %102 : vector<8x8xf32>
    %104 = math.exp %103 : vector<8x8xf32>
    %cst_36 = arith.constant dense<0.000000e+00> : vector<8xf32>
    %105 = vector.multi_reduction <add>, %104, %cst_36 [1] : vector<8x8xf32> to vector<8xf32>
    %106 = vector.shape_cast %105 : vector<8xf32> to vector<8x1xf32>
    %107 = tpu.reciprocal %106 : vector<8x1xf32> -> vector<8x1xf32>
    %108 = vector.broadcast %107 : vector<8x1xf32> to vector<8x8xf32>
    %109 = arith.mulf %104, %108 : vector<8x8xf32>
    %cst_37 = arith.constant dense<0.000000e+00> : vector<8x8xf32>
    %110 = tpu.matmul %109, %98, %cst_37 {dimension_numbers = #tpu.dot_dimension_numbers<[1], [0], [0], [1], [0, 0, 1, 1], [], []>} : vector<8x8xf32>, vector<8x8xf32>, vector<8x8xf32> -> vector<8x8xf32>
    %111 = vector.extract_strided_slice %11 {offsets = [0, 0], sizes = [8, 32], strides = [1, 1]} : vector<32x32xf32> to vector<8x32xf32>
    %cst_38 = arith.constant dense<0.000000e+00> : vector<8x32xf32>
    %112 = tpu.matmul %110, %111, %cst_38 {dimension_numbers = #tpu.dot_dimension_numbers<[1], [0], [0], [1], [0, 0, 1, 1], [], []>} : vector<8x8xf32>, vector<8x32xf32>, vector<8x32xf32> -> vector<8x32xf32>
    %113 = arith.addf %95, %112 : vector<8x32xf32>
    %114 = vector.extract_strided_slice %92 {offsets = [0, 8], sizes = [8, 8], strides = [1, 1]} : vector<8x32xf32> to vector<8x8xf32>
    %115 = vector.extract_strided_slice %93 {offsets = [0, 8], sizes = [8, 8], strides = [1, 1]} : vector<8x32xf32> to vector<8x8xf32>
    %116 = vector.extract_strided_slice %94 {offsets = [0, 8], sizes = [8, 8], strides = [1, 1]} : vector<8x32xf32> to vector<8x8xf32>
    %cst_39 = arith.constant dense<0.000000e+00> : vector<8x8xf32>
    %117 = tpu.matmul %114, %115, %cst_39 {dimension_numbers = #tpu.dot_dimension_numbers<[1], [1], [0], [0], [0, 0, 1, 0], [], []>} : vector<8x8xf32>, vector<8x8xf32>, vector<8x8xf32> -> vector<8x8xf32>
    %cst_40 = arith.constant dense<0xFF800000> : vector<8xf32>
    %118 = vector.multi_reduction <maximumf>, %117, %cst_40 [1] : vector<8x8xf32> to vector<8xf32>
    %119 = vector.shape_cast %118 : vector<8xf32> to vector<8x1xf32>
    %120 = vector.broadcast %119 : vector<8x1xf32> to vector<8x8xf32>
    %121 = arith.subf %117, %120 : vector<8x8xf32>
    %122 = math.exp %121 : vector<8x8xf32>
    %cst_41 = arith.constant dense<0.000000e+00> : vector<8xf32>
    %123 = vector.multi_reduction <add>, %122, %cst_41 [1] : vector<8x8xf32> to vector<8xf32>
    %124 = vector.shape_cast %123 : vector<8xf32> to vector<8x1xf32>
    %125 = tpu.reciprocal %124 : vector<8x1xf32> -> vector<8x1xf32>
    %126 = vector.broadcast %125 : vector<8x1xf32> to vector<8x8xf32>
    %127 = arith.mulf %122, %126 : vector<8x8xf32>
    %cst_42 = arith.constant dense<0.000000e+00> : vector<8x8xf32>
    %128 = tpu.matmul %127, %116, %cst_42 {dimension_numbers = #tpu.dot_dimension_numbers<[1], [0], [0], [1], [0, 0, 1, 1], [], []>} : vector<8x8xf32>, vector<8x8xf32>, vector<8x8xf32> -> vector<8x8xf32>
    %129 = vector.extract_strided_slice %11 {offsets = [8, 0], sizes = [8, 32], strides = [1, 1]} : vector<32x32xf32> to vector<8x32xf32>
    %cst_43 = arith.constant dense<0.000000e+00> : vector<8x32xf32>
    %130 = tpu.matmul %128, %129, %cst_43 {dimension_numbers = #tpu.dot_dimension_numbers<[1], [0], [0], [1], [0, 0, 1, 1], [], []>} : vector<8x8xf32>, vector<8x32xf32>, vector<8x32xf32> -> vector<8x32xf32>
    %131 = arith.addf %113, %130 : vector<8x32xf32>
    %132 = vector.extract_strided_slice %92 {offsets = [0, 16], sizes = [8, 8], strides = [1, 1]} : vector<8x32xf32> to vector<8x8xf32>
    %133 = vector.extract_strided_slice %93 {offsets = [0, 16], sizes = [8, 8], strides = [1, 1]} : vector<8x32xf32> to vector<8x8xf32>
    %134 = vector.extract_strided_slice %94 {offsets = [0, 16], sizes = [8, 8], strides = [1, 1]} : vector<8x32xf32> to vector<8x8xf32>
    %cst_44 = arith.constant dense<0.000000e+00> : vector<8x8xf32>
    %135 = tpu.matmul %132, %133, %cst_44 {dimension_numbers = #tpu.dot_dimension_numbers<[1], [1], [0], [0], [0, 0, 1, 0], [], []>} : vector<8x8xf32>, vector<8x8xf32>, vector<8x8xf32> -> vector<8x8xf32>
    %cst_45 = arith.constant dense<0xFF800000> : vector<8xf32>
    %136 = vector.multi_reduction <maximumf>, %135, %cst_45 [1] : vector<8x8xf32> to vector<8xf32>
    %137 = vector.shape_cast %136 : vector<8xf32> to vector<8x1xf32>
    %138 = vector.broadcast %137 : vector<8x1xf32> to vector<8x8xf32>
    %139 = arith.subf %135, %138 : vector<8x8xf32>
    %140 = math.exp %139 : vector<8x8xf32>
    %cst_46 = arith.constant dense<0.000000e+00> : vector<8xf32>
    %141 = vector.multi_reduction <add>, %140, %cst_46 [1] : vector<8x8xf32> to vector<8xf32>
    %142 = vector.shape_cast %141 : vector<8xf32> to vector<8x1xf32>
    %143 = tpu.reciprocal %142 : vector<8x1xf32> -> vector<8x1xf32>
    %144 = vector.broadcast %143 : vector<8x1xf32> to vector<8x8xf32>
    %145 = arith.mulf %140, %144 : vector<8x8xf32>
    %cst_47 = arith.constant dense<0.000000e+00> : vector<8x8xf32>
    %146 = tpu.matmul %145, %134, %cst_47 {dimension_numbers = #tpu.dot_dimension_numbers<[1], [0], [0], [1], [0, 0, 1, 1], [], []>} : vector<8x8xf32>, vector<8x8xf32>, vector<8x8xf32> -> vector<8x8xf32>
    %147 = vector.extract_strided_slice %11 {offsets = [16, 0], sizes = [8, 32], strides = [1, 1]} : vector<32x32xf32> to vector<8x32xf32>
    %cst_48 = arith.constant dense<0.000000e+00> : vector<8x32xf32>
    %148 = tpu.matmul %146, %147, %cst_48 {dimension_numbers = #tpu.dot_dimension_numbers<[1], [0], [0], [1], [0, 0, 1, 1], [], []>} : vector<8x8xf32>, vector<8x32xf32>, vector<8x32xf32> -> vector<8x32xf32>
    %149 = arith.addf %131, %148 : vector<8x32xf32>
    %150 = vector.extract_strided_slice %92 {offsets = [0, 24], sizes = [8, 8], strides = [1, 1]} : vector<8x32xf32> to vector<8x8xf32>
    %151 = vector.extract_strided_slice %93 {offsets = [0, 24], sizes = [8, 8], strides = [1, 1]} : vector<8x32xf32> to vector<8x8xf32>
    %152 = vector.extract_strided_slice %94 {offsets = [0, 24], sizes = [8, 8], strides = [1, 1]} : vector<8x32xf32> to vector<8x8xf32>
    %cst_49 = arith.constant dense<0.000000e+00> : vector<8x8xf32>
    %153 = tpu.matmul %150, %151, %cst_49 {dimension_numbers = #tpu.dot_dimension_numbers<[1], [1], [0], [0], [0, 0, 1, 0], [], []>} : vector<8x8xf32>, vector<8x8xf32>, vector<8x8xf32> -> vector<8x8xf32>
    %cst_50 = arith.constant dense<0xFF800000> : vector<8xf32>
    %154 = vector.multi_reduction <maximumf>, %153, %cst_50 [1] : vector<8x8xf32> to vector<8xf32>
    %155 = vector.shape_cast %154 : vector<8xf32> to vector<8x1xf32>
    %156 = vector.broadcast %155 : vector<8x1xf32> to vector<8x8xf32>
    %157 = arith.subf %153, %156 : vector<8x8xf32>
    %158 = math.exp %157 : vector<8x8xf32>
    %cst_51 = arith.constant dense<0.000000e+00> : vector<8xf32>
    %159 = vector.multi_reduction <add>, %158, %cst_51 [1] : vector<8x8xf32> to vector<8xf32>
    %160 = vector.shape_cast %159 : vector<8xf32> to vector<8x1xf32>
    %161 = tpu.reciprocal %160 : vector<8x1xf32> -> vector<8x1xf32>
    %162 = vector.broadcast %161 : vector<8x1xf32> to vector<8x8xf32>
    %163 = arith.mulf %158, %162 : vector<8x8xf32>
    %cst_52 = arith.constant dense<0.000000e+00> : vector<8x8xf32>
    %164 = tpu.matmul %163, %152, %cst_52 {dimension_numbers = #tpu.dot_dimension_numbers<[1], [0], [0], [1], [0, 0, 1, 1], [], []>} : vector<8x8xf32>, vector<8x8xf32>, vector<8x8xf32> -> vector<8x8xf32>
    %165 = vector.extract_strided_slice %11 {offsets = [24, 0], sizes = [8, 32], strides = [1, 1]} : vector<32x32xf32> to vector<8x32xf32>
    %cst_53 = arith.constant dense<0.000000e+00> : vector<8x32xf32>
    %166 = tpu.matmul %164, %165, %cst_53 {dimension_numbers = #tpu.dot_dimension_numbers<[1], [0], [0], [1], [0, 0, 1, 1], [], []>} : vector<8x8xf32>, vector<8x32xf32>, vector<8x32xf32> -> vector<8x32xf32>
    %167 = arith.addf %149, %166 : vector<8x32xf32>
    %168 = vector.broadcast %12 : vector<1x32xf32> to vector<8x32xf32>
    %169 = arith.addf %167, %168 : vector<8x32xf32>
    %c8 = arith.constant 8 : index
    %c0_54 = arith.constant 0 : index
    %170 = vector.load %arg5[%c8, %c0_54] : memref<16x32xf32, #tpu.memory_space<vmem>>, vector<8x32xf32>
    tpu.vector_store %arg5[%c8, %c0_54], %169 {strides = array<i32>} : memref<16x32xf32, #tpu.memory_space<vmem>>, vector<8x32xf32>,
    return
  }
}

</mosaic_0001>

<llo_original>
// kernel: tpu_custom_call.1
$region0: #{tpu_custom_call.1}
  #allocation0 [shape = 'u32[]', space=smem, size = 0x4, offset = 0x4, fixed_abs, tag = 'smem constant byte address 0x4 - core index']
  #allocation1 [shape = 'u32[72,128]{1,0:T(1,128)}', space=vmem, size = 0x9000, scoped, tag = 'internal scratch']
  %s0 = inlined_call_operand.hbm [shape: f32[16,32], index: 0, kind: input, shape index: {}]
  %s1 = inlined_call_operand.hbm [shape: f32[32,96], index: 1, kind: input, shape index: {}]
  %s2 = inlined_call_operand.vmem [shape: f32[1,96], index: 2, kind: input, shape index: {}]
  %s3 = inlined_call_operand.hbm [shape: f32[32,32], index: 3, kind: input, shape index: {}]
  %s4 = inlined_call_operand.vmem [shape: f32[1,32], index: 4, kind: input, shape index: {}]
  %s5 = inlined_call_operand.hbm [shape: f32[16,32], index: 5, kind: output, shape index: {}]
  %s6 = sld [smem:[#allocation0]]
  $region42: #{tpu_custom_call.1} parent=0
    _
  %s8 = ssub.s32 1, %s6
  %s9 = scalar_select 0, %s8, %s6
  $region1: #{tpu_custom_call.1} parent=0
    #allocation2 [shape = 'u8[8192]{0}', space=vmem, size = 0x2000, scoped, tag = 'input window, operand 0, single buffered']
    #allocation3 [shape = 's32[1]{0}', space=sflag, size = 0x4, scoped, tag = 'scoped memory for tpu_custom_call.1']
    #allocation4 [shape = 's32[1]{0}', space=sflag, size = 0x4, scoped, tag = 'scoped memory for tpu_custom_call.1']
    #allocation5 [shape = 'u8[16384]{0}', space=vmem, size = 0x4000, scoped, tag = 'input window, operand 1, single buffered']
    #allocation6 [shape = 's32[1]{0}', space=sflag, size = 0x4, scoped, tag = 'scoped memory for tpu_custom_call.1']
    #allocation7 [shape = 'u8[16384]{0}', space=vmem, size = 0x4000, scoped, tag = 'input window, operand 3, single buffered']
    #allocation8 [shape = 'u8[8192]{0}', space=vmem, size = 0x2000, scoped, tag = 'output window, operand 0, single buffered']
    %10 = vsyncpa [#allocation3], 0
    %11 = vsyncpa [#allocation6], 0
    %12 = vsyncpa [#allocation4], 0
    // Predicated region
    $region2: #{tpu_custom_call.1} parent=1 // pred_check
      _
    $region3: #{tpu_custom_call.1} parent=1 // pred_check_branch
      %14 = sbr.rel (0) target = $region5
    $region4: #{tpu_custom_call.1} parent=1 // pred_region
      %16 = vsyncadd [#allocation3], 0
      %s17 = sshll.u32 %s0, 4
      %s18 = int_to_ptr.hbm [resolvable:$true] %s17
      %s19 = sshll.u32 [#allocation2], 4
      %s20 = int_to_ptr.vmem [resolvable:$true] %s19
      %25 = dma.hbm_to_vmem [thread:$0]  %s18, 256, %s20, [#allocation3], 128, 128, 8
    $region5: #{tpu_custom_call.1} parent=1 // pred_fallthru
      _
    // Predicated region
    $region6: #{tpu_custom_call.1} parent=1 // pred_check
      _
    $region7: #{tpu_custom_call.1} parent=1 // pred_check_branch
      %27 = sbr.rel (0) target = $region9
    $region8: #{tpu_custom_call.1} parent=1 // pred_region
      %29 = vsyncadd [#allocation6], 0
      %s30 = sshll.u32 %s1, 4
      %s31 = int_to_ptr.hbm [resolvable:$true] %s30
      %s32 = sshll.u32 [#allocation5], 4
      %s33 = int_to_ptr.vmem [resolvable:$true] %s32
      %38 = dma.hbm_to_vmem [thread:$0]  %s31, 512, %s33, [#allocation6], 128, 128, 8
    $region9: #{tpu_custom_call.1} parent=1 // pred_fallthru
      _
    // Predicated region
    $region10: #{tpu_custom_call.1} parent=1 // pred_check
      _
    $region11: #{tpu_custom_call.1} parent=1 // pred_check_branch
      %40 = sbr.rel (0) target = $region13
    $region12: #{tpu_custom_call.1} parent=1 // pred_region
      _
    $region13: #{tpu_custom_call.1} parent=1 // pred_fallthru
      _
    // Predicated region
    $region14: #{tpu_custom_call.1} parent=1 // pred_check
      _
    $region15: #{tpu_custom_call.1} parent=1 // pred_check_branch
      %42 = sbr.rel (0) target = $region17
    $region16: #{tpu_custom_call.1} parent=1 // pred_region
      %44 = vsyncadd [#allocation6], 0
      %s45 = sshll.u32 %s3, 4
      %s46 = int_to_ptr.hbm [resolvable:$true] %s45
      %s47 = sshll.u32 [#allocation7], 4
      %s48 = int_to_ptr.vmem [resolvable:$true] %s47
      %53 = dma.hbm_to_vmem [thread:$0]  %s46, 512, %s48, [#allocation6], 128, 128, 8
    $region17: #{tpu_custom_call.1} parent=1 // pred_fallthru
      _
    // Predicated region
    $region18: #{tpu_custom_call.1} parent=1 // pred_check
      _
    $region19: #{tpu_custom_call.1} parent=1 // pred_check_branch
      %55 = sbr.rel (0) target = $region21
    $region20: #{tpu_custom_call.1} parent=1 // pred_region
      _
    $region21: #{tpu_custom_call.1} parent=1 // pred_fallthru
      _
    // Predicated region
    $region22: #{tpu_custom_call.1} parent=1 // pred_check
      _
    $region23: #{tpu_custom_call.1} parent=1 // pred_check_branch
      %57 = sbr.rel (0) target = $region25
    $region24: #{tpu_custom_call.1} parent=1 // pred_region
      %59 = dma.done [#allocation3], 256
    $region25: #{tpu_custom_call.1} parent=1 // pred_fallthru
      _
    // Predicated region
    $region26: #{tpu_custom_call.1} parent=1 // pred_check
      _
    $region27: #{tpu_custom_call.1} parent=1 // pred_check_branch
      %61 = sbr.rel (0) target = $region29
    $region28: #{tpu_custom_call.1} parent=1 // pred_region
      %63 = dma.done [#allocation6], 512
    $region29: #{tpu_custom_call.1} parent=1 // pred_fallthru
      _
    // Predicated region
    $region30: #{tpu_custom_call.1} parent=1 // pred_check
      _
    $region31: #{tpu_custom_call.1} parent=1 // pred_check_branch
      %65 = sbr.rel (0) target = $region33
    $region32: #{tpu_custom_call.1} parent=1 // pred_region
      %67 = dma.done [#allocation6], 512
    $region33: #{tpu_custom_call.1} parent=1 // pred_fallthru
      _
    %v68 = vld [vmem:[#allocation2] sm:$0xff]
    %v69 = vld [vmem:[#allocation2 + $0x8] sm:$0xff]
    %v70 = vld [vmem:[#allocation5] sm:$0xff]
    %v71 = vld [vmem:[#allocation5 + $0x8] sm:$0xff]
    %v72 = vld [vmem:[#allocation5 + $0x10] sm:$0xff]
    %v73 = vld [vmem:[#allocation5 + $0x18] sm:$0xff]
    %v74 = vld [vmem:[%s2] sm:$0x1]
    %v76 = vperm.slane %v74, 0
    %vm78 = vcmask 261120
    %v80 = vsel %vm78, %v68, 0
    %v83 = vsel %vm78, %v69, 0
    %85 = vmatpush.msra.mxu0 0.0
    %86 = vmatpush.msra.mxu0 0.0
    %87 = vmatpush.msra.mxu0 0.0
    %88 = vmatpush.msra.mxu0 0.0
    %89 = vmatpush.msra.mxu0 0.0
    %90 = vmatpush.msra.mxu0 0.0
    %91 = vmatpush.msra.mxu0 0.0
    %92 = vmatpush.msra.mxu0 0.0
    %93 = vmatpush.msra.mxu0 0.0
    %94 = vmatpush.msra.mxu0 0.0
    %95 = vmatpush.msra.mxu0 0.0
    %96 = vmatpush.msra.mxu0 0.0
    %97 = vmatpush.msra.mxu0 %v73
    %98 = vmatpush.msra.mxu0 %v72
    %99 = vmatpush.msra.mxu0 %v71
    %100 = vmatpush.msra.mxu0 %v70
    %101 = vmatmul.f32.gmra.mxu0 %v80
    %v102 = vpop.f32.mrf.mxu0
    %v103 = vadd.f32 %v76, %v102
    %104 = vmatmul.f32.gmra.mxu0 %v83
    %v105 = vpop.f32.mrf.mxu0
    %v106 = vadd.f32 %v76, %v105
    %107 = vdwg.mxu0
    %v108 = vmul.f32 %v103, 0.35355338
    %v109 = vmul.f32 %v106, 0.35355338
    %v110 = vld [vmem:[#allocation7] sm:$0xff]
    %v111 = vld [vmem:[#allocation7 + $0x8] sm:$0xff]
    %v112 = vld [vmem:[#allocation7 + $0x10] sm:$0xff]
    %v113 = vld [vmem:[#allocation7 + $0x18] sm:$0xff]
    %v114 = vld [vmem:[%s4] sm:$0x1]
    %116 = vrot.lane.b32.xlu0 %v103, 96
    %v117 = vpop.permute.xlu0 %116
    %vm118 = vcmask 64512
    %v120 = vsel %vm118, %v108, 0
    %v122 = vsel %vm118, %v117, 0
    %124 = vmatpush.xpose.msra.mxu0 0.0
    %125 = vmatpush.xpose.msra.mxu0 0.0
    %126 = vmatpush.xpose.msra.mxu0 0.0
    %127 = vmatpush.xpose.msra.mxu0 0.0
    %128 = vmatpush.xpose.msra.mxu0 0.0
    %129 = vmatpush.xpose.msra.mxu0 0.0
    %130 = vmatpush.xpose.msra.mxu0 0.0
    %131 = vmatpush.xpose.msra.mxu0 0.0
    %132 = vmatpush.xpose.msra.mxu0 0.0
    %133 = vmatpush.xpose.msra.mxu0 0.0
    %134 = vmatpush.xpose.msra.mxu0 0.0
    %135 = vmatpush.xpose.msra.mxu0 0.0
    %136 = vmatpush.xpose.msra.mxu0 0.0
    %137 = vmatpush.xpose.msra.mxu0 0.0
    %138 = vmatpush.xpose.msra.mxu0 0.0
    %139 = vmatpush.xpose.msra.mxu0 %v122
    %140 = vmatmul.f32.gmra.mxu0 %v120
    %v141 = vpop.f32.mrf.mxu0
    %v142 = vadd.f32 0.0, %v141
    %143 = vdwg.mxu0
    %v144 = vsel %vm118, %v142, -inf
    %145 = vmax.xlane.f32.xlu0 %v144
    %v146 = vpop.xlane.xlu0 %145
    %v147 = vsub.f32 %v142, %v146
    %v148 = vmul.f32 %v147, 1.442695
    %v149 = vpow.pop %v148
    %v150 = vsel %vm118, %v149, 0.0
    %151 = vadd.xlane.f32.xlu0 %v150
    %v152 = vpop.xlane.xlu0 %151
    %v153 = vrcp.pop %v152
    %v154 = vmul.f32 %v152, %v153
    %v155 = vsub.f32 1.0, %v154
    %v156 = vmul.f32 %v153, %v155
    %v157 = vadd.f32 %v153, %v156
    %vm158 = vweird.f32 %v152
    %vm159 = vweird.f32 %v153
    %vm160 = vmor %vm158, %vm159
    %v161 = vsel %vm160, %v153, %v157
    %v162 = vand.u32 2147483647, %v152
    %vm163 = vcmp.eq.f32.partialorder %v162, 8.507059e+37
    %v164 = vand.u32 %v152, 2147483648
    %v165 = vor.u32 1.1754944e-38, %v164
    %v166 = vsel %vm163, %v165, %v161
    %v167 = vmul.f32 %v149, %v166
    %168 = vrot.lane.b32.xlu0 %v103, 64
    %v169 = vpop.permute.xlu0 %168
    %v172 = vsel %vm118, %v167, 0
    %174 = vmatpush.msra.mxu0 0.0
    %175 = vmatpush.msra.mxu0 0.0
    %176 = vmatpush.msra.mxu0 0.0
    %177 = vmatpush.msra.mxu0 0.0
    %178 = vmatpush.msra.mxu0 0.0
    %179 = vmatpush.msra.mxu0 0.0
    %180 = vmatpush.msra.mxu0 0.0
    %181 = vmatpush.msra.mxu0 0.0
    %182 = vmatpush.msra.mxu0 0.0
    %183 = vmatpush.msra.mxu0 0.0
    %184 = vmatpush.msra.mxu0 0.0
    %185 = vmatpush.msra.mxu0 0.0
    %186 = vmatpush.msra.mxu0 0.0
    %187 = vmatpush.msra.mxu0 0.0
    %188 = vmatpush.msra.mxu0 0.0
    %189 = vmatpush.msra.mxu0 %v169
    %190 = vmatmul.f32.gmra.mxu0 %v172
    %v191 = vpop.f32.mrf.mxu0
    %v192 = vadd.f32 0.0, %v191
    %193 = vdwg.mxu0
    %194 = vrot.lane.b32.xlu0 %v108, 120
    %v195 = vpop.permute.xlu0 %194
    %196 = vrot.lane.b32.xlu0 %v103, 88
    %v197 = vpop.permute.xlu0 %196
    %v198 = vsel %vm118, %v195, 0
    %v200 = vsel %vm118, %v197, 0
    %202 = vmatpush.xpose.msra.mxu0 0.0
    %203 = vmatpush.xpose.msra.mxu0 0.0
    %204 = vmatpush.xpose.msra.mxu0 0.0
    %205 = vmatpush.xpose.msra.mxu0 0.0
    %206 = vmatpush.xpose.msra.mxu0 0.0
    %207 = vmatpush.xpose.msra.mxu0 0.0
    %208 = vmatpush.xpose.msra.mxu0 0.0
    %209 = vmatpush.xpose.msra.mxu0 0.0
    %210 = vmatpush.xpose.msra.mxu0 0.0
    %211 = vmatpush.xpose.msra.mxu0 0.0
    %212 = vmatpush.xpose.msra.mxu0 0.0
    %213 = vmatpush.xpose.msra.mxu0 0.0
    %214 = vmatpush.xpose.msra.mxu0 0.0
    %215 = vmatpush.xpose.msra.mxu0 0.0
    %216 = vmatpush.xpose.msra.mxu0 0.0
    %217 = vmatpush.xpose.msra.mxu0 %v200
    %218 = vmatmul.f32.gmra.mxu0 %v198
    %v219 = vpop.f32.mrf.mxu0
    %v220 = vadd.f32 0.0, %v219
    %221 = vdwg.mxu0
    %v222 = vsel %vm118, %v220, -inf
    %223 = vmax.xlane.f32.xlu0 %v222
    %v224 = vpop.xlane.xlu0 %223
    %v225 = vsub.f32 %v220, %v224
    %v226 = vmul.f32 %v225, 1.442695
    %v227 = vpow.pop %v226
    %v228 = vsel %vm118, %v227, 0.0
    %229 = vadd.xlane.f32.xlu0 %v228
    %v230 = vpop.xlane.xlu0 %229
    %v231 = vrcp.pop %v230
    %v232 = vmul.f32 %v230, %v231
    %v233 = vsub.f32 1.0, %v232
    %v234 = vmul.f32 %v231, %v233
    %v235 = vadd.f32 %v231, %v234
    %vm236 = vweird.f32 %v230
    %vm237 = vweird.f32 %v231
    %vm238 = vmor %vm236, %vm237
    %v239 = vsel %vm238, %v231, %v235
    %v240 = vand.u32 2147483647, %v230
    %vm241 = vcmp.eq.f32.partialorder %v240, 8.507059e+37
    %v242 = vand.u32 %v230, 2147483648
    %v243 = vor.u32 1.1754944e-38, %v242
    %v244 = vsel %vm241, %v243, %v239
    %v245 = vmul.f32 %v227, %v244
    %246 = vrot.lane.b32.xlu0 %v103, 56
    %v247 = vpop.permute.xlu0 %246
    %v250 = vsel %vm118, %v245, 0
    %252 = vmatpush.msra.mxu0 0.0
    %253 = vmatpush.msra.mxu0 0.0
    %254 = vmatpush.msra.mxu0 0.0
    %255 = vmatpush.msra.mxu0 0.0
    %256 = vmatpush.msra.mxu0 0.0
    %257 = vmatpush.msra.mxu0 0.0
    %258 = vmatpush.msra.mxu0 0.0
    %259 = vmatpush.msra.mxu0 0.0
    %260 = vmatpush.msra.mxu0 0.0
    %261 = vmatpush.msra.mxu0 0.0
    %262 = vmatpush.msra.mxu0 0.0
    %263 = vmatpush.msra.mxu0 0.0
    %264 = vmatpush.msra.mxu0 0.0
    %265 = vmatpush.msra.mxu0 0.0
    %266 = vmatpush.msra.mxu0 0.0
    %267 = vmatpush.msra.mxu0 %v247
    %268 = vmatmul.f32.gmra.mxu0 %v250
    %v269 = vpop.f32.mrf.mxu0
    %v270 = vadd.f32 0.0, %v269
    %271 = vdwg.mxu0
    %v273 = vsel %vm118, %v270, 0
    %275 = vmatpush.msra.mxu0 0.0
    %276 = vmatpush.msra.mxu0 0.0
    %277 = vmatpush.msra.mxu0 0.0
    %278 = vmatpush.msra.mxu0 0.0
    %279 = vmatpush.msra.mxu0 0.0
    %280 = vmatpush.msra.mxu0 0.0
    %281 = vmatpush.msra.mxu0 0.0
    %282 = vmatpush.msra.mxu0 0.0
    %283 = vmatpush.msra.mxu0 0.0
    %284 = vmatpush.msra.mxu0 0.0
    %285 = vmatpush.msra.mxu0 0.0
    %286 = vmatpush.msra.mxu0 0.0
    %287 = vmatpush.msra.mxu0 0.0
    %288 = vmatpush.msra.mxu0 0.0
    %289 = vmatpush.msra.mxu0 0.0
    %290 = vmatpush.msra.mxu0 %v111
    %291 = vmatmul.f32.gmra.mxu0 %v273
    %v292 = vpop.f32.mrf.mxu0
    %v293 = vadd.f32 0.0, %v292
    %294 = vdwg.mxu0
    %v296 = vsel %vm118, %v192, 0
    %298 = vmatpush.msra.mxu0 0.0
    %299 = vmatpush.msra.mxu0 0.0
    %300 = vmatpush.msra.mxu0 0.0
    %301 = vmatpush.msra.mxu0 0.0
    %302 = vmatpush.msra.mxu0 0.0
    %303 = vmatpush.msra.mxu0 0.0
    %304 = vmatpush.msra.mxu0 0.0
    %305 = vmatpush.msra.mxu0 0.0
    %306 = vmatpush.msra.mxu0 0.0
    %307 = vmatpush.msra.mxu0 0.0
    %308 = vmatpush.msra.mxu0 0.0
    %309 = vmatpush.msra.mxu0 0.0
    %310 = vmatpush.msra.mxu0 0.0
    %311 = vmatpush.msra.mxu0 0.0
    %312 = vmatpush.msra.mxu0 0.0
    %313 = vmatpush.msra.mxu0 %v110
    %314 = vmatmul.f32.gmra.mxu0 %v296
    %v315 = vpop.f32.mrf.mxu0
    %v316 = vadd.f32 %v293, %v315
    %317 = vdwg.mxu0
    %318 = vrot.lane.b32.xlu0 %v108, 112
    %v319 = vpop.permute.xlu0 %318
    %320 = vrot.lane.b32.xlu0 %v103, 80
    %v321 = vpop.permute.xlu0 %320
    %v322 = vsel %vm118, %v319, 0
    %v324 = vsel %vm118, %v321, 0
    %326 = vmatpush.xpose.msra.mxu0 0.0
    %327 = vmatpush.xpose.msra.mxu0 0.0
    %328 = vmatpush.xpose.msra.mxu0 0.0
    %329 = vmatpush.xpose.msra.mxu0 0.0
    %330 = vmatpush.xpose.msra.mxu0 0.0
    %331 = vmatpush.xpose.msra.mxu0 0.0
    %332 = vmatpush.xpose.msra.mxu0 0.0
    %333 = vmatpush.xpose.msra.mxu0 0.0
    %334 = vmatpush.xpose.msra.mxu0 0.0
    %335 = vmatpush.xpose.msra.mxu0 0.0
    %336 = vmatpush.xpose.msra.mxu0 0.0
    %337 = vmatpush.xpose.msra.mxu0 0.0
    %338 = vmatpush.xpose.msra.mxu0 0.0
    %339 = vmatpush.xpose.msra.mxu0 0.0
    %340 = vmatpush.xpose.msra.mxu0 0.0
    %341 = vmatpush.xpose.msra.mxu0 %v324
    %342 = vmatmul.f32.gmra.mxu0 %v322
    %v343 = vpop.f32.mrf.mxu0
    %v344 = vadd.f32 0.0, %v343
    %345 = vdwg.mxu0
    %v346 = vsel %vm118, %v344, -inf
    %347 = vmax.xlane.f32.xlu0 %v346
    %v348 = vpop.xlane.xlu0 %347
    %v349 = vsub.f32 %v344, %v348
    %v350 = vmul.f32 %v349, 1.442695
    %v351 = vpow.pop %v350
    %v352 = vsel %vm118, %v351, 0.0
    %353 = vadd.xlane.f32.xlu0 %v352
    %v354 = vpop.xlane.xlu0 %353
    %v355 = vrcp.pop %v354
    %v356 = vmul.f32 %v354, %v355
    %v357 = vsub.f32 1.0, %v356
    %v358 = vmul.f32 %v355, %v357
    %v359 = vadd.f32 %v355, %v358
    %vm360 = vweird.f32 %v354
    %vm361 = vweird.f32 %v355
    %vm362 = vmor %vm360, %vm361
    %v363 = vsel %vm362, %v355, %v359
    %v364 = vand.u32 2147483647, %v354
    %vm365 = vcmp.eq.f32.partialorder %v364, 8.507059e+37
    %v366 = vand.u32 %v354, 2147483648
    %v367 = vor.u32 1.1754944e-38, %v366
    %v368 = vsel %vm365, %v367, %v363
    %v369 = vmul.f32 %v351, %v368
    %370 = vrot.lane.b32.xlu0 %v103, 48
    %v371 = vpop.permute.xlu0 %370
    %v374 = vsel %vm118, %v369, 0
    %376 = vmatpush.msra.mxu0 0.0
    %377 = vmatpush.msra.mxu0 0.0
    %378 = vmatpush.msra.mxu0 0.0
    %379 = vmatpush.msra.mxu0 0.0
    %380 = vmatpush.msra.mxu0 0.0
    %381 = vmatpush.msra.mxu0 0.0
    %382 = vmatpush.msra.mxu0 0.0
    %383 = vmatpush.msra.mxu0 0.0
    %384 = vmatpush.msra.mxu0 0.0
    %385 = vmatpush.msra.mxu0 0.0
    %386 = vmatpush.msra.mxu0 0.0
    %387 = vmatpush.msra.mxu0 0.0
    %388 = vmatpush.msra.mxu0 0.0
    %389 = vmatpush.msra.mxu0 0.0
    %390 = vmatpush.msra.mxu0 0.0
    %391 = vmatpush.msra.mxu0 %v371
    %392 = vmatmul.f32.gmra.mxu0 %v374
    %v393 = vpop.f32.mrf.mxu0
    %v394 = vadd.f32 0.0, %v393
    %395 = vdwg.mxu0
    %v397 = vsel %vm118, %v394, 0
    %399 = vmatpush.msra.mxu0 0.0
    %400 = vmatpush.msra.mxu0 0.0
    %401 = vmatpush.msra.mxu0 0.0
    %402 = vmatpush.msra.mxu0 0.0
    %403 = vmatpush.msra.mxu0 0.0
    %404 = vmatpush.msra.mxu0 0.0
    %405 = vmatpush.msra.mxu0 0.0
    %406 = vmatpush.msra.mxu0 0.0
    %407 = vmatpush.msra.mxu0 0.0
    %408 = vmatpush.msra.mxu0 0.0
    %409 = vmatpush.msra.mxu0 0.0
    %410 = vmatpush.msra.mxu0 0.0
    %411 = vmatpush.msra.mxu0 0.0
    %412 = vmatpush.msra.mxu0 0.0
    %413 = vmatpush.msra.mxu0 0.0
    %414 = vmatpush.msra.mxu0 %v112
    %415 = vmatmul.f32.gmra.mxu0 %v397
    %v416 = vpop.f32.mrf.mxu0
    %v417 = vadd.f32 0.0, %v416
    %418 = vdwg.mxu0
    %v419 = vadd.f32 %v316, %v417
    %420 = vrot.lane.b32.xlu0 %v108, 104
    %v421 = vpop.permute.xlu0 %420
    %422 = vrot.lane.b32.xlu0 %v103, 72
    %v423 = vpop.permute.xlu0 %422
    %v424 = vsel %vm118, %v421, 0
    %v426 = vsel %vm118, %v423, 0
    %428 = vmatpush.xpose.msra.mxu0 0.0
    %429 = vmatpush.xpose.msra.mxu0 0.0
    %430 = vmatpush.xpose.msra.mxu0 0.0
    %431 = vmatpush.xpose.msra.mxu0 0.0
    %432 = vmatpush.xpose.msra.mxu0 0.0
    %433 = vmatpush.xpose.msra.mxu0 0.0
    %434 = vmatpush.xpose.msra.mxu0 0.0
    %435 = vmatpush.xpose.msra.mxu0 0.0
    %436 = vmatpush.xpose.msra.mxu0 0.0
    %437 = vmatpush.xpose.msra.mxu0 0.0
    %438 = vmatpush.xpose.msra.mxu0 0.0
    %439 = vmatpush.xpose.msra.mxu0 0.0
    %440 = vmatpush.xpose.msra.mxu0 0.0
    %441 = vmatpush.xpose.msra.mxu0 0.0
    %442 = vmatpush.xpose.msra.mxu0 0.0
    %443 = vmatpush.xpose.msra.mxu0 %v426
    %444 = vmatmul.f32.gmra.mxu0 %v424
    %v445 = vpop.f32.mrf.mxu0
    %v446 = vadd.f32 0.0, %v445
    %447 = vdwg.mxu0
    %v448 = vsel %vm118, %v446, -inf
    %449 = vmax.xlane.f32.xlu0 %v448
    %v450 = vpop.xlane.xlu0 %449
    %v451 = vsub.f32 %v446, %v450
    %v452 = vmul.f32 %v451, 1.442695
    %v453 = vpow.pop %v452
    %v454 = vsel %vm118, %v453, 0.0
    %455 = vadd.xlane.f32.xlu0 %v454
    %v456 = vpop.xlane.xlu0 %455
    %v457 = vrcp.pop %v456
    %v458 = vmul.f32 %v456, %v457
    %v459 = vsub.f32 1.0, %v458
    %v460 = vmul.f32 %v457, %v459
    %v461 = vadd.f32 %v457, %v460
    %vm462 = vweird.f32 %v456
    %vm463 = vweird.f32 %v457
    %vm464 = vmor %vm462, %vm463
    %v465 = vsel %vm464, %v457, %v461
    %v466 = vand.u32 2147483647, %v456
    %vm467 = vcmp.eq.f32.partialorder %v466, 8.507059e+37
    %v468 = vand.u32 %v456, 2147483648
    %v469 = vor.u32 1.1754944e-38, %v468
    %v470 = vsel %vm467, %v469, %v465
    %v471 = vmul.f32 %v453, %v470
    %472 = vrot.lane.b32.xlu0 %v103, 40
    %v473 = vpop.permute.xlu0 %472
    %v476 = vsel %vm118, %v471, 0
    %478 = vmatpush.msra.mxu0 0.0
    %479 = vmatpush.msra.mxu0 0.0
    %480 = vmatpush.msra.mxu0 0.0
    %481 = vmatpush.msra.mxu0 0.0
    %482 = vmatpush.msra.mxu0 0.0
    %483 = vmatpush.msra.mxu0 0.0
    %484 = vmatpush.msra.mxu0 0.0
    %485 = vmatpush.msra.mxu0 0.0
    %486 = vmatpush.msra.mxu0 0.0
    %487 = vmatpush.msra.mxu0 0.0
    %488 = vmatpush.msra.mxu0 0.0
    %489 = vmatpush.msra.mxu0 0.0
    %490 = vmatpush.msra.mxu0 0.0
    %491 = vmatpush.msra.mxu0 0.0
    %492 = vmatpush.msra.mxu0 0.0
    %493 = vmatpush.msra.mxu0 %v473
    %494 = vmatmul.f32.gmra.mxu0 %v476
    %v495 = vpop.f32.mrf.mxu0
    %v496 = vadd.f32 0.0, %v495
    %497 = vdwg.mxu0
    %v499 = vsel %vm118, %v496, 0
    %501 = vmatpush.msra.mxu0 0.0
    %502 = vmatpush.msra.mxu0 0.0
    %503 = vmatpush.msra.mxu0 0.0
    %504 = vmatpush.msra.mxu0 0.0
    %505 = vmatpush.msra.mxu0 0.0
    %506 = vmatpush.msra.mxu0 0.0
    %507 = vmatpush.msra.mxu0 0.0
    %508 = vmatpush.msra.mxu0 0.0
    %509 = vmatpush.msra.mxu0 0.0
    %510 = vmatpush.msra.mxu0 0.0
    %511 = vmatpush.msra.mxu0 0.0
    %512 = vmatpush.msra.mxu0 0.0
    %513 = vmatpush.msra.mxu0 0.0
    %514 = vmatpush.msra.mxu0 0.0
    %515 = vmatpush.msra.mxu0 0.0
    %516 = vmatpush.msra.mxu0 %v113
    %517 = vmatmul.f32.gmra.mxu0 %v499
    %v518 = vpop.f32.mrf.mxu0
    %v519 = vadd.f32 0.0, %v518
    %520 = vdwg.mxu0
    %v521 = vadd.f32 %v419, %v519
    %v523 = vperm.slane %v114, 0
    %v525 = vadd.f32 %v521, %v523
    %526 = vst.msk [vmem:[#allocation8] sm:$0xff] %vm78, %v525
    %528 = vrot.lane.b32.xlu0 %v106, 96
    %v529 = vpop.permute.xlu0 %528
    %v531 = vsel %vm118, %v109, 0
    %v533 = vsel %vm118, %v529, 0
    %535 = vmatpush.xpose.msra.mxu0 0.0
    %536 = vmatpush.xpose.msra.mxu0 0.0
    %537 = vmatpush.xpose.msra.mxu0 0.0
    %538 = vmatpush.xpose.msra.mxu0 0.0
    %539 = vmatpush.xpose.msra.mxu0 0.0
    %540 = vmatpush.xpose.msra.mxu0 0.0
    %541 = vmatpush.xpose.msra.mxu0 0.0
    %542 = vmatpush.xpose.msra.mxu0 0.0
    %543 = vmatpush.xpose.msra.mxu0 0.0
    %544 = vmatpush.xpose.msra.mxu0 0.0
    %545 = vmatpush.xpose.msra.mxu0 0.0
    %546 = vmatpush.xpose.msra.mxu0 0.0
    %547 = vmatpush.xpose.msra.mxu0 0.0
    %548 = vmatpush.xpose.msra.mxu0 0.0
    %549 = vmatpush.xpose.msra.mxu0 0.0
    %550 = vmatpush.xpose.msra.mxu0 %v533
    %551 = vmatmul.f32.gmra.mxu0 %v531
    %v552 = vpop.f32.mrf.mxu0
    %v553 = vadd.f32 0.0, %v552
    %554 = vdwg.mxu0
    %v555 = vsel %vm118, %v553, -inf
    %556 = vmax.xlane.f32.xlu0 %v555
    %v557 = vpop.xlane.xlu0 %556
    %v558 = vsub.f32 %v553, %v557
    %v559 = vmul.f32 %v558, 1.442695
    %v560 = vpow.pop %v559
    %v561 = vsel %vm118, %v560, 0.0
    %562 = vadd.xlane.f32.xlu0 %v561
    %v563 = vpop.xlane.xlu0 %562
    %v564 = vrcp.pop %v563
    %v565 = vmul.f32 %v563, %v564
    %v566 = vsub.f32 1.0, %v565
    %v567 = vmul.f32 %v564, %v566
    %v568 = vadd.f32 %v564, %v567
    %vm569 = vweird.f32 %v563
    %vm570 = vweird.f32 %v564
    %vm571 = vmor %vm569, %vm570
    %v572 = vsel %vm571, %v564, %v568
    %v573 = vand.u32 2147483647, %v563
    %vm574 = vcmp.eq.f32.partialorder %v573, 8.507059e+37
    %v575 = vand.u32 %v563, 2147483648
    %v576 = vor.u32 1.1754944e-38, %v575
    %v577 = vsel %vm574, %v576, %v572
    %v578 = vmul.f32 %v560, %v577
    %579 = vrot.lane.b32.xlu0 %v106, 64
    %v580 = vpop.permute.xlu0 %579
    %v583 = vsel %vm118, %v578, 0
    %585 = vmatpush.msra.mxu0 0.0
    %586 = vmatpush.msra.mxu0 0.0
    %587 = vmatpush.msra.mxu0 0.0
    %588 = vmatpush.msra.mxu0 0.0
    %589 = vmatpush.msra.mxu0 0.0
    %590 = vmatpush.msra.mxu0 0.0
    %591 = vmatpush.msra.mxu0 0.0
    %592 = vmatpush.msra.mxu0 0.0
    %593 = vmatpush.msra.mxu0 0.0
    %594 = vmatpush.msra.mxu0 0.0
    %595 = vmatpush.msra.mxu0 0.0
    %596 = vmatpush.msra.mxu0 0.0
    %597 = vmatpush.msra.mxu0 0.0
    %598 = vmatpush.msra.mxu0 0.0
    %599 = vmatpush.msra.mxu0 0.0
    %600 = vmatpush.msra.mxu0 %v580
    %601 = vmatmul.f32.gmra.mxu0 %v583
    %v602 = vpop.f32.mrf.mxu0
    %v603 = vadd.f32 0.0, %v602
    %604 = vdwg.mxu0
    %605 = vrot.lane.b32.xlu0 %v109, 120
    %v606 = vpop.permute.xlu0 %605
    %607 = vrot.lane.b32.xlu0 %v106, 88
    %v608 = vpop.permute.xlu0 %607
    %v609 = vsel %vm118, %v606, 0
    %v611 = vsel %vm118, %v608, 0
    %613 = vmatpush.xpose.msra.mxu0 0.0
    %614 = vmatpush.xpose.msra.mxu0 0.0
    %615 = vmatpush.xpose.msra.mxu0 0.0
    %616 = vmatpush.xpose.msra.mxu0 0.0
    %617 = vmatpush.xpose.msra.mxu0 0.0
    %618 = vmatpush.xpose.msra.mxu0 0.0
    %619 = vmatpush.xpose.msra.mxu0 0.0
    %620 = vmatpush.xpose.msra.mxu0 0.0
    %621 = vmatpush.xpose.msra.mxu0 0.0
    %622 = vmatpush.xpose.msra.mxu0 0.0
    %623 = vmatpush.xpose.msra.mxu0 0.0
    %624 = vmatpush.xpose.msra.mxu0 0.0
    %625 = vmatpush.xpose.msra.mxu0 0.0
    %626 = vmatpush.xpose.msra.mxu0 0.0
    %627 = vmatpush.xpose.msra.mxu0 0.0
    %628 = vmatpush.xpose.msra.mxu0 %v611
    %629 = vmatmul.f32.gmra.mxu0 %v609
    %v630 = vpop.f32.mrf.mxu0
    %v631 = vadd.f32 0.0, %v630
    %632 = vdwg.mxu0
    %v633 = vsel %vm118, %v631, -inf
    %634 = vmax.xlane.f32.xlu0 %v633
    %v635 = vpop.xlane.xlu0 %634
    %v636 = vsub.f32 %v631, %v635
    %v637 = vmul.f32 %v636, 1.442695
    %v638 = vpow.pop %v637
    %v639 = vsel %vm118, %v638, 0.0
    %640 = vadd.xlane.f32.xlu0 %v639
    %v641 = vpop.xlane.xlu0 %640
    %v642 = vrcp.pop %v641
    %v643 = vmul.f32 %v641, %v642
    %v644 = vsub.f32 1.0, %v643
    %v645 = vmul.f32 %v642, %v644
    %v646 = vadd.f32 %v642, %v645
    %vm647 = vweird.f32 %v641
    %vm648 = vweird.f32 %v642
    %vm649 = vmor %vm647, %vm648
    %v650 = vsel %vm649, %v642, %v646
    %v651 = vand.u32 2147483647, %v641
    %vm652 = vcmp.eq.f32.partialorder %v651, 8.507059e+37
    %v653 = vand.u32 %v641, 2147483648
    %v654 = vor.u32 1.1754944e-38, %v653
    %v655 = vsel %vm652, %v654, %v650
    %v656 = vmul.f32 %v638, %v655
    %657 = vrot.lane.b32.xlu0 %v106, 56
    %v658 = vpop.permute.xlu0 %657
    %v661 = vsel %vm118, %v656, 0
    %663 = vmatpush.msra.mxu0 0.0
    %664 = vmatpush.msra.mxu0 0.0
    %665 = vmatpush.msra.mxu0 0.0
    %666 = vmatpush.msra.mxu0 0.0
    %667 = vmatpush.msra.mxu0 0.0
    %668 = vmatpush.msra.mxu0 0.0
    %669 = vmatpush.msra.mxu0 0.0
    %670 = vmatpush.msra.mxu0 0.0
    %671 = vmatpush.msra.mxu0 0.0
    %672 = vmatpush.msra.mxu0 0.0
    %673 = vmatpush.msra.mxu0 0.0
    %674 = vmatpush.msra.mxu0 0.0
    %675 = vmatpush.msra.mxu0 0.0
    %676 = vmatpush.msra.mxu0 0.0
    %677 = vmatpush.msra.mxu0 0.0
    %678 = vmatpush.msra.mxu0 %v658
    %679 = vmatmul.f32.gmra.mxu0 %v661
    %v680 = vpop.f32.mrf.mxu0
    %v681 = vadd.f32 0.0, %v680
    %682 = vdwg.mxu0
    %v684 = vsel %vm118, %v681, 0
    %686 = vmatpush.msra.mxu0 0.0
    %687 = vmatpush.msra.mxu0 0.0
    %688 = vmatpush.msra.mxu0 0.0
    %689 = vmatpush.msra.mxu0 0.0
    %690 = vmatpush.msra.mxu0 0.0
    %691 = vmatpush.msra.mxu0 0.0
    %692 = vmatpush.msra.mxu0 0.0
    %693 = vmatpush.msra.mxu0 0.0
    %694 = vmatpush.msra.mxu0 0.0
    %695 = vmatpush.msra.mxu0 0.0
    %696 = vmatpush.msra.mxu0 0.0
    %697 = vmatpush.msra.mxu0 0.0
    %698 = vmatpush.msra.mxu0 0.0
    %699 = vmatpush.msra.mxu0 0.0
    %700 = vmatpush.msra.mxu0 0.0
    %701 = vmatpush.msra.mxu0 %v111
    %702 = vmatmul.f32.gmra.mxu0 %v684
    %v703 = vpop.f32.mrf.mxu0
    %v704 = vadd.f32 0.0, %v703
    %705 = vdwg.mxu0
    %v707 = vsel %vm118, %v603, 0
    %709 = vmatpush.msra.mxu0 0.0
    %710 = vmatpush.msra.mxu0 0.0
    %711 = vmatpush.msra.mxu0 0.0
    %712 = vmatpush.msra.mxu0 0.0
    %713 = vmatpush.msra.mxu0 0.0
    %714 = vmatpush.msra.mxu0 0.0
    %715 = vmatpush.msra.mxu0 0.0
    %716 = vmatpush.msra.mxu0 0.0
    %717 = vmatpush.msra.mxu0 0.0
    %718 = vmatpush.msra.mxu0 0.0
    %719 = vmatpush.msra.mxu0 0.0
    %720 = vmatpush.msra.mxu0 0.0
    %721 = vmatpush.msra.mxu0 0.0
    %722 = vmatpush.msra.mxu0 0.0
    %723 = vmatpush.msra.mxu0 0.0
    %724 = vmatpush.msra.mxu0 %v110
    %725 = vmatmul.f32.gmra.mxu0 %v707
    %v726 = vpop.f32.mrf.mxu0
    %v727 = vadd.f32 %v704, %v726
    %728 = vdwg.mxu0
    %729 = vrot.lane.b32.xlu0 %v109, 112
    %v730 = vpop.permute.xlu0 %729
    %731 = vrot.lane.b32.xlu0 %v106, 80
    %v732 = vpop.permute.xlu0 %731
    %v733 = vsel %vm118, %v730, 0
    %v735 = vsel %vm118, %v732, 0
    %737 = vmatpush.xpose.msra.mxu0 0.0
    %738 = vmatpush.xpose.msra.mxu0 0.0
    %739 = vmatpush.xpose.msra.mxu0 0.0
    %740 = vmatpush.xpose.msra.mxu0 0.0
    %741 = vmatpush.xpose.msra.mxu0 0.0
    %742 = vmatpush.xpose.msra.mxu0 0.0
    %743 = vmatpush.xpose.msra.mxu0 0.0
    %744 = vmatpush.xpose.msra.mxu0 0.0
    %745 = vmatpush.xpose.msra.mxu0 0.0
    %746 = vmatpush.xpose.msra.mxu0 0.0
    %747 = vmatpush.xpose.msra.mxu0 0.0
    %748 = vmatpush.xpose.msra.mxu0 0.0
    %749 = vmatpush.xpose.msra.mxu0 0.0
    %750 = vmatpush.xpose.msra.mxu0 0.0
    %751 = vmatpush.xpose.msra.mxu0 0.0
    %752 = vmatpush.xpose.msra.mxu0 %v735
    %753 = vmatmul.f32.gmra.mxu0 %v733
    %v754 = vpop.f32.mrf.mxu0
    %v755 = vadd.f32 0.0, %v754
    %756 = vdwg.mxu0
    %v757 = vsel %vm118, %v755, -inf
    %758 = vmax.xlane.f32.xlu0 %v757
    %v759 = vpop.xlane.xlu0 %758
    %v760 = vsub.f32 %v755, %v759
    %v761 = vmul.f32 %v760, 1.442695
    %v762 = vpow.pop %v761
    %v763 = vsel %vm118, %v762, 0.0
    %764 = vadd.xlane.f32.xlu0 %v763
    %v765 = vpop.xlane.xlu0 %764
    %v766 = vrcp.pop %v765
    %v767 = vmul.f32 %v765, %v766
    %v768 = vsub.f32 1.0, %v767
    %v769 = vmul.f32 %v766, %v768
    %v770 = vadd.f32 %v766, %v769
    %vm771 = vweird.f32 %v765
    %vm772 = vweird.f32 %v766
    %vm773 = vmor %vm771, %vm772
    %v774 = vsel %vm773, %v766, %v770
    %v775 = vand.u32 2147483647, %v765
    %vm776 = vcmp.eq.f32.partialorder %v775, 8.507059e+37
    %v777 = vand.u32 %v765, 2147483648
    %v778 = vor.u32 1.1754944e-38, %v777
    %v779 = vsel %vm776, %v778, %v774
    %v780 = vmul.f32 %v762, %v779
    %781 = vrot.lane.b32.xlu0 %v106, 48
    %v782 = vpop.permute.xlu0 %781
    %v785 = vsel %vm118, %v780, 0
    %787 = vmatpush.msra.mxu0 0.0
    %788 = vmatpush.msra.mxu0 0.0
    %789 = vmatpush.msra.mxu0 0.0
    %790 = vmatpush.msra.mxu0 0.0
    %791 = vmatpush.msra.mxu0 0.0
    %792 = vmatpush.msra.mxu0 0.0
    %793 = vmatpush.msra.mxu0 0.0
    %794 = vmatpush.msra.mxu0 0.0
    %795 = vmatpush.msra.mxu0 0.0
    %796 = vmatpush.msra.mxu0 0.0
    %797 = vmatpush.msra.mxu0 0.0
    %798 = vmatpush.msra.mxu0 0.0
    %799 = vmatpush.msra.mxu0 0.0
    %800 = vmatpush.msra.mxu0 0.0
    %801 = vmatpush.msra.mxu0 0.0
    %802 = vmatpush.msra.mxu0 %v782
    %803 = vmatmul.f32.gmra.mxu0 %v785
    %v804 = vpop.f32.mrf.mxu0
    %v805 = vadd.f32 0.0, %v804
    %806 = vdwg.mxu0
    %v808 = vsel %vm118, %v805, 0
    %810 = vmatpush.msra.mxu0 0.0
    %811 = vmatpush.msra.mxu0 0.0
    %812 = vmatpush.msra.mxu0 0.0
    %813 = vmatpush.msra.mxu0 0.0
    %814 = vmatpush.msra.mxu0 0.0
    %815 = vmatpush.msra.mxu0 0.0
    %816 = vmatpush.msra.mxu0 0.0
    %817 = vmatpush.msra.mxu0 0.0
    %818 = vmatpush.msra.mxu0 0.0
    %819 = vmatpush.msra.mxu0 0.0
    %820 = vmatpush.msra.mxu0 0.0
    %821 = vmatpush.msra.mxu0 0.0
    %822 = vmatpush.msra.mxu0 0.0
    %823 = vmatpush.msra.mxu0 0.0
    %824 = vmatpush.msra.mxu0 0.0
    %825 = vmatpush.msra.mxu0 %v112
    %826 = vmatmul.f32.gmra.mxu0 %v808
    %v827 = vpop.f32.mrf.mxu0
    %v828 = vadd.f32 0.0, %v827
    %829 = vdwg.mxu0
    %v830 = vadd.f32 %v727, %v828
    %831 = vrot.lane.b32.xlu0 %v109, 104
    %v832 = vpop.permute.xlu0 %831
    %833 = vrot.lane.b32.xlu0 %v106, 72
    %v834 = vpop.permute.xlu0 %833
    %v835 = vsel %vm118, %v832, 0
    %v837 = vsel %vm118, %v834, 0
    %839 = vmatpush.xpose.msra.mxu0 0.0
    %840 = vmatpush.xpose.msra.mxu0 0.0
    %841 = vmatpush.xpose.msra.mxu0 0.0
    %842 = vmatpush.xpose.msra.mxu0 0.0
    %843 = vmatpush.xpose.msra.mxu0 0.0
    %844 = vmatpush.xpose.msra.mxu0 0.0
    %845 = vmatpush.xpose.msra.mxu0 0.0
    %846 = vmatpush.xpose.msra.mxu0 0.0
    %847 = vmatpush.xpose.msra.mxu0 0.0
    %848 = vmatpush.xpose.msra.mxu0 0.0
    %849 = vmatpush.xpose.msra.mxu0 0.0
    %850 = vmatpush.xpose.msra.mxu0 0.0
    %851 = vmatpush.xpose.msra.mxu0 0.0
    %852 = vmatpush.xpose.msra.mxu0 0.0
    %853 = vmatpush.xpose.msra.mxu0 0.0
    %854 = vmatpush.xpose.msra.mxu0 %v837
    %855 = vmatmul.f32.gmra.mxu0 %v835
    %v856 = vpop.f32.mrf.mxu0
    %v857 = vadd.f32 0.0, %v856
    %858 = vdwg.mxu0
    %v859 = vsel %vm118, %v857, -inf
    %860 = vmax.xlane.f32.xlu0 %v859
    %v861 = vpop.xlane.xlu0 %860
    %v862 = vsub.f32 %v857, %v861
    %v863 = vmul.f32 %v862, 1.442695
    %v864 = vpow.pop %v863
    %v865 = vsel %vm118, %v864, 0.0
    %866 = vadd.xlane.f32.xlu0 %v865
    %v867 = vpop.xlane.xlu0 %866
    %v868 = vrcp.pop %v867
    %v869 = vmul.f32 %v867, %v868
    %v870 = vsub.f32 1.0, %v869
    %v871 = vmul.f32 %v868, %v870
    %v872 = vadd.f32 %v868, %v871
    %vm873 = vweird.f32 %v867
    %vm874 = vweird.f32 %v868
    %vm875 = vmor %vm873, %vm874
    %v876 = vsel %vm875, %v868, %v872
    %v877 = vand.u32 2147483647, %v867
    %vm878 = vcmp.eq.f32.partialorder %v877, 8.507059e+37
    %v879 = vand.u32 %v867, 2147483648
    %v880 = vor.u32 1.1754944e-38, %v879
    %v881 = vsel %vm878, %v880, %v876
    %v882 = vmul.f32 %v864, %v881
    %883 = vrot.lane.b32.xlu0 %v106, 40
    %v884 = vpop.permute.xlu0 %883
    %v887 = vsel %vm118, %v882, 0
    %889 = vmatpush.msra.mxu0 0.0
    %890 = vmatpush.msra.mxu0 0.0
    %891 = vmatpush.msra.mxu0 0.0
    %892 = vmatpush.msra.mxu0 0.0
    %893 = vmatpush.msra.mxu0 0.0
    %894 = vmatpush.msra.mxu0 0.0
    %895 = vmatpush.msra.mxu0 0.0
    %896 = vmatpush.msra.mxu0 0.0
    %897 = vmatpush.msra.mxu0 0.0
    %898 = vmatpush.msra.mxu0 0.0
    %899 = vmatpush.msra.mxu0 0.0
    %900 = vmatpush.msra.mxu0 0.0
    %901 = vmatpush.msra.mxu0 0.0
    %902 = vmatpush.msra.mxu0 0.0
    %903 = vmatpush.msra.mxu0 0.0
    %904 = vmatpush.msra.mxu0 %v884
    %905 = vmatmul.f32.gmra.mxu0 %v887
    %v906 = vpop.f32.mrf.mxu0
    %v907 = vadd.f32 0.0, %v906
    %908 = vdwg.mxu0
    %v910 = vsel %vm118, %v907, 0
    %912 = vmatpush.msra.mxu0 0.0
    %913 = vmatpush.msra.mxu0 0.0
    %914 = vmatpush.msra.mxu0 0.0
    %915 = vmatpush.msra.mxu0 0.0
    %916 = vmatpush.msra.mxu0 0.0
    %917 = vmatpush.msra.mxu0 0.0
    %918 = vmatpush.msra.mxu0 0.0
    %919 = vmatpush.msra.mxu0 0.0
    %920 = vmatpush.msra.mxu0 0.0
    %921 = vmatpush.msra.mxu0 0.0
    %922 = vmatpush.msra.mxu0 0.0
    %923 = vmatpush.msra.mxu0 0.0
    %924 = vmatpush.msra.mxu0 0.0
    %925 = vmatpush.msra.mxu0 0.0
    %926 = vmatpush.msra.mxu0 0.0
    %927 = vmatpush.msra.mxu0 %v113
    %928 = vmatmul.f32.gmra.mxu0 %v910
    %v929 = vpop.f32.mrf.mxu0
    %v930 = vadd.f32 0.0, %v929
    %931 = vdwg.mxu0
    %v932 = vadd.f32 %v830, %v930
    %v933 = vadd.f32 %v932, %v523
    %934 = vst.msk [vmem:[#allocation8 + $0x8] sm:$0xff] %vm78, %v933
    // Predicated region
    $region34: #{tpu_custom_call.1} parent=1 // pred_check
      _
    $region35: #{tpu_custom_call.1} parent=1 // pred_check_branch
      %936 = sbr.rel (0) target = $region37
    $region36: #{tpu_custom_call.1} parent=1 // pred_region
      %938 = vsyncadd [#allocation4], 0
      %s939 = sshll.u32 [#allocation8], 4
      %s940 = int_to_ptr.vmem [resolvable:$true] %s939
      %s941 = sshll.u32 %s5, 4
      %s942 = int_to_ptr.hbm [resolvable:$true] %s941
      %947 = dma.vmem_to_hbm [thread:$0]  %s940, 256, %s942, [#allocation4], 128, 128, 8
    $region37: #{tpu_custom_call.1} parent=1 // pred_fallthru
      _
    // Predicated region
    $region38: #{tpu_custom_call.1} parent=1 // pred_check
      _
    $region39: #{tpu_custom_call.1} parent=1 // pred_check_branch
      %949 = sbr.rel (0) target = $region41
    $region40: #{tpu_custom_call.1} parent=1 // pred_region
      %951 = dma.done [#allocation4], 256
    $region41: #{tpu_custom_call.1} parent=1 // pred_fallthru
      _
    %952 = vsyncpa [#allocation3], 1
    %953 = vsyncpa [#allocation6], 1
    %954 = vsyncpa [#allocation4], 1

</llo_original>
